<compile_context>
chip_gen: v7x
topology: tpu7x:2x2x1
jax: 0.10.0
libtpu: 0.0.40
codegen_flags: <defaults>
</compile_context>

<pallas_src>
import jax
import jax.numpy as jnp
from jax.experimental import pallas as pl
from jax.experimental.pallas import tpu as pltpu

# Only chunk into multiple concurrent DMAs when there is enough data to
# amortize the extra descriptors; a single HBM->HBM DMA already runs at
# the HBM roofline for modest sizes.
_CHUNK_THRESHOLD_BYTES = 4 * 1024 * 1024  # 4 MiB
_MAX_DMA_CHUNKS = 4


def _make_identity_dma_kernel(chunks):
    """Build a kernel that copies x_ref -> o_ref directly HBM->HBM via DMA.

    `chunks` is either None (single whole-array DMA) or a static list of
    (start, size) splits along axis 0; each split is issued as its own DMA on
    its own semaphore so several DMAs overlap before we wait on all of them.
    """
    if chunks is None:
        def kernel(x_ref, o_ref, sem):
            cp = pltpu.make_async_copy(x_ref, o_ref, sem)
            cp.start()
            cp.wait()
        return kernel

    def kernel(x_ref, o_ref, sems):
        copies = []
        for idx, (start, size) in enumerate(chunks):  # static Python loop
            cp = pltpu.make_async_copy(
                x_ref.at[pl.ds(start, size)],
                o_ref.at[pl.ds(start, size)],
                sems.at[idx],
            )
            cp.start()
            copies.append(cp)
        for cp in copies:
            cp.wait()
    return kernel


def identity(x):
    """Forward pass of Identity: returns a tensor equal to x (same shape/dtype)."""
    if x.size == 0:
        # Nothing to copy; `return x` is exactly the reference semantics.
        return x

    orig_shape = x.shape
    # Present at least 1-D to the DMA engine; contiguous reshape is metadata-only.
    work = x.reshape((1,)) if x.ndim == 0 else x

    total_bytes = work.size * work.dtype.itemsize
    leading = work.shape[0]

    chunks = None
    if total_bytes >= _CHUNK_THRESHOLD_BYTES and leading >= 2:
        n = min(_MAX_DMA_CHUNKS, leading)
        base, rem = divmod(leading, n)
        chunks, start = [], 0
        for i in range(n):
            size = base + (1 if i < rem else 0)
            chunks.append((start, size))
            start += size

    kernel = _make_identity_dma_kernel(chunks)
    sem_shape = (pltpu.SemaphoreType.DMA(())
                 if chunks is None
                 else pltpu.SemaphoreType.DMA((len(chunks),)))

    out = pl.pallas_call(
        kernel,
        out_shape=jax.ShapeDtypeStruct(work.shape, work.dtype),
        in_specs=[pl.BlockSpec(memory_space=pl.ANY)],
        out_specs=pl.BlockSpec(memory_space=pl.ANY),
        scratch_shapes=[sem_shape],
    )(work)

    return out.reshape(orig_shape)


if __name__ == "__main__":
    # Small shapes consistent with the module usage: batch=2, channels=4, spatial=16.
    N, C, H, W = 2, 4, 16, 16
    key = jax.random.PRNGKey(0)
    x = jax.random.normal(key, (N, C, H, W), dtype=jnp.float32)

    out = identity(x)
    out = jax.block_until_ready(out)

    assert out.shape == x.shape, out.shape
    assert out.dtype == x.dtype, out.dtype
    assert jnp.array_equal(out, x), "identity kernel output differs from input"

    print("KERNEL_OK")
</pallas_src>

<mosaic_0001>
module attributes {stable_mosaic.version = 11 : i64} {
  func.func @kernel(%arg0: memref<2x4x16x16xf32, #tpu.memory_space<any>>, %arg1: memref<2x4x16x16xf32, #tpu.memory_space<any>>, %arg2: memref<!tpu.dma_semaphore, #tpu.memory_space<semaphore_mem>>) attributes {dimension_semantics = [], scalar_prefetch = 0 : i64, scratch_operands = 1 : i64, tpu.core_type = #tpu.core_type<tc>} {
    tpu.enqueue_dma source(%arg0 : memref<2x4x16x16xf32, #tpu.memory_space<any>>) target(%arg1 : memref<2x4x16x16xf32, #tpu.memory_space<any>>) target_semaphore(%arg2 : memref<!tpu.dma_semaphore, #tpu.memory_space<semaphore_mem>>)
    tpu.wait_dma2 semaphore(%arg2 : memref<!tpu.dma_semaphore, #tpu.memory_space<semaphore_mem>>) src(%arg0 : memref<2x4x16x16xf32, #tpu.memory_space<any>>) dst(%arg1 : memref<2x4x16x16xf32, #tpu.memory_space<any>>)
    return
  }
}

</mosaic_0001>

<llo_original>
// kernel: tpu_custom_call.1
$region0: #{tpu_custom_call.1}
  #allocation0 [shape = 'u32[]', space=smem, size = 0x4, offset = 0x4, fixed_abs, tag = 'smem constant byte address 0x4 - core index']
  #allocation1 [shape = 'u32[144,128]{1,0:T(1,128)}', space=vmem, size = 0x12000, scoped, tag = 'internal scratch']
  #allocation2 [shape = 's32[1]{0}', space=sflag, size = 0x4, scoped, tag = 'scratch operand']
  #allocation3 [shape = 's32[]', space=sflag, size = 0x4, offset = 0, fixed_abs, tag = 'sflag constant byte address 0x0 - dummy sync flag']
  #allocation4 [shape = 'u32[0]{0}', space=smem, size = 0, offset = 0, fixed_abs, tag = 'smem constant byte address 0x0 - null']
  %s0 = inlined_call_operand.hbm [shape: f32[2,4,16,16], index: 0, kind: input, shape index: {}]
  %s1 = inlined_call_operand.hbm [shape: f32[2,4,16,16], index: 1, kind: output, shape index: {}]
  %s2 = sld [smem:[#allocation0]]
  $region2: #{tpu_custom_call.1} parent=0
    _
  %s4 = ssub.s32 1, %s2
  %s5 = scalar_select 0, %s4, %s2
  %s7 = sshll.u32 1, 14
  %s8 = sxor.u32 4294967295, %s7
  %s11 = sshll.u32 3, 24
  %s12 = sxor.u32 4294967295, %s11
  %s13 = sand.u32 0, %s12
  %s15 = sor.u32 %s13, 0
  %18 = dma.general %s0, 2048, %s1, [#allocation2], [#allocation3], [#allocation4], %s15, 0
  %s19 = smul.u32 2, 4
  %s20 = smul.u32 %s19, 16
  %s21 = smul.u32 %s20, 1
  %s22 = sshll.u32 %s21, 4
  %23 = dma.done [#allocation2], %s22
  %24 = vsyncmov [#allocation2]
  %s25 = vpop.sfrf %24
  %p26 = scmp.eq.s32.totalorder %s25, 0
  %p27 = pneg %p26
  %29 = shalt.err (%p27)

</llo_original>
